<compile_context>
chip_gen: v7x
topology: tpu7x:2x2x1
jax: 0.10.0
libtpu: 0.0.40
codegen_flags: <defaults>
</compile_context>

<pallas_src>
import functools

import jax
import jax.numpy as jnp
from jax.experimental import pallas as pl
from jax.experimental.pallas import tpu as pltpu

LANE = 128  # lane-pad width for hidden / output channels


# ----------------------------------------------------------------------------
# Fused Pallas kernel: 3x GCNConv (+ReLU) + Linear + log_softmax
# ----------------------------------------------------------------------------
def _gcn_fused_kernel(a_ref, x_ref, w1_ref, b1_ref, w2_ref, b2_ref,
                      w3_ref, b3_ref, wl_ref, bl_ref, o_ref, *, out_channels):
    a = a_ref[...].astype(jnp.bfloat16)  # normalized adjacency, load once

    def gcn_layer(h, w_ref, b_ref):
        # GCNConv: A_norm @ (h @ W) + b, then ReLU.  bf16 MXU inputs, f32 acc.
        hw = jnp.dot(h.astype(jnp.bfloat16), w_ref[...].astype(jnp.bfloat16),
                     preferred_element_type=jnp.float32)
        z = jnp.dot(a, hw.astype(jnp.bfloat16),
                    preferred_element_type=jnp.float32) + b_ref[...]
        return jnp.maximum(z, 0.0)

    h = gcn_layer(x_ref[...], w1_ref, b1_ref)
    # TODO(synk): F.dropout(p=0.2, training=True) between layers is identity
    # in eval mode; stochastic training-mode dropout not implemented here.
    h = gcn_layer(h, w2_ref, b2_ref)
    h = gcn_layer(h, w3_ref, b3_ref)

    # Final Linear + masked (lane-padded) log_softmax, all in f32.
    logits = jnp.dot(h.astype(jnp.bfloat16), wl_ref[...].astype(jnp.bfloat16),
                     preferred_element_type=jnp.float32) + bl_ref[...]
    lane = jax.lax.broadcasted_iota(jnp.int32, logits.shape, dimension=1)
    logits = jnp.where(lane < out_channels, logits, jnp.float32(-1e30))
    m = jnp.max(logits, axis=-1, keepdims=True)
    z = logits - m
    lse = jnp.log(jnp.sum(jnp.exp(z), axis=-1, keepdims=True))
    o_ref[...] = z - lse


# ----------------------------------------------------------------------------
# Graph glue: dense symmetric-normalized adjacency (GCN norm, self-loops)
# ----------------------------------------------------------------------------
def build_gcn_adj(edge_index, num_nodes, edge_weight=None):
    """A[dst, src] = d_dst^{-1/2} * w * d_src^{-1/2}, self-loops (w=1) added."""
    src = edge_index[0]
    dst = edge_index[1]
    if edge_weight is None:
        edge_weight = jnp.ones(src.shape[0], dtype=jnp.float32)
    loop = jnp.arange(num_nodes, dtype=src.dtype)
    src = jnp.concatenate([src, loop])
    dst = jnp.concatenate([dst, loop])
    w = jnp.concatenate([edge_weight.astype(jnp.float32),
                         jnp.ones((num_nodes,), jnp.float32)])
    deg = jnp.zeros((num_nodes,), jnp.float32).at[dst].add(w)
    dinv = jnp.where(deg > 0.0, jax.lax.rsqrt(deg), 0.0)
    norm = dinv[src] * w * dinv[dst]
    adj = jnp.zeros((num_nodes, num_nodes), jnp.float32).at[dst, src].add(norm)
    return adj


# ----------------------------------------------------------------------------
# Wrapper: pad channels to 128 lanes, single grid-less pallas_call
# ----------------------------------------------------------------------------
def _pad2d(w, rows, cols):
    return jnp.pad(w, ((0, rows - w.shape[0]), (0, cols - w.shape[1])))


def gcn_forward(params, x, edge_index, edge_weight=None):
    n, cin = x.shape
    hid = params["w1"].shape[1]
    cout = params["lin_w"].shape[1]
    assert hid <= LANE and cout <= LANE

    # TODO(synk): for a static graph, A can be precomputed once outside jit.
    a = build_gcn_adj(edge_index, n, edge_weight)

    # Lane-pad weights / biases so every in-kernel activation and the single
    # HBM output store are 128-lane dense.  Padded rows/cols are zero, so the
    # math is unchanged; padded logits are masked inside the kernel.
    w1 = _pad2d(params["w1"], cin, LANE)
    b1 = _pad2d(params["b1"], 1, LANE)
    w2 = _pad2d(params["w2"], LANE, LANE)
    b2 = _pad2d(params["b2"], 1, LANE)
    w3 = _pad2d(params["w3"], LANE, LANE)
    b3 = _pad2d(params["b3"], 1, LANE)
    wl = _pad2d(params["lin_w"], LANE, LANE)
    bl = _pad2d(params["lin_b"], 1, LANE)

    kernel = functools.partial(_gcn_fused_kernel, out_channels=cout)
    vmem_spec = pl.BlockSpec(memory_space=pltpu.MemorySpace.VMEM)
    out_padded = pl.pallas_call(
        kernel,
        out_shape=jax.ShapeDtypeStruct((n, LANE), jnp.float32),
        in_specs=[vmem_spec] * 10,
        out_specs=vmem_spec,
    )(a, x, w1, b1, w2, b2, w3, b3, wl, bl)
    return out_padded[:, :cout]


# ----------------------------------------------------------------------------
# Parameter init (GCNConv: one weight + bias per layer; final Linear)
# ----------------------------------------------------------------------------
def init_params(key, in_channels, hidden_channels, out_channels):
    def dense(k, fan_in, fan_out):
        return (jax.random.normal(k, (fan_in, fan_out), jnp.float32)
                * (1.0 / jnp.sqrt(fan_in)))

    keys = jax.random.split(key, 5)
    return {
        "w1": dense(keys[0], in_channels, hidden_channels),
        "b1": jnp.zeros((1, hidden_channels), jnp.float32),
        "w2": dense(keys[1], hidden_channels, hidden_channels),
        "b2": jnp.zeros((1, hidden_channels), jnp.float32),
        "w3": dense(keys[2], hidden_channels, hidden_channels),
        "b3": jnp.zeros((1, hidden_channels), jnp.float32),
        "lin_w": dense(keys[3], hidden_channels, out_channels),
        "lin_b": (jax.random.normal(keys[4], (1, out_channels), jnp.float32)
                  * 0.01),
    }


if __name__ == "__main__":
    key = jax.random.PRNGKey(0)
    k_x, k_e, k_w, k_p = jax.random.split(key, 4)

    num_nodes = 64
    num_edges = 256
    in_channels, hidden_channels, out_channels = 16, 32, 8

    x = jax.random.normal(k_x, (num_nodes, in_channels), jnp.float32)
    edge_index = jax.random.randint(k_e, (2, num_edges), 0, num_nodes,
                                    dtype=jnp.int32)
    edge_weight = jax.random.uniform(k_w, (num_edges,), jnp.float32)

    params = init_params(k_p, in_channels, hidden_channels, out_channels)

    out = jax.jit(functools.partial(gcn_forward, params))(
        x, edge_index, edge_weight)
    out = jax.block_until_ready(out)

    assert out.shape == (num_nodes, out_channels)
    assert bool(jnp.all(jnp.isfinite(out)))
    # rows of log_softmax should exp-sum to 1
    row_sums = jnp.sum(jnp.exp(out), axis=-1)
    assert bool(jnp.all(jnp.abs(row_sums - 1.0) < 1e-2))
    print("KERNEL_OK")
</pallas_src>

<mosaic_0001>
module attributes {stable_mosaic.version = 11 : i64} {
  func.func private @main(%arg0: i32) attributes {dimension_semantics = [#tpu.dimension_semantics<core_parallel>], iteration_bounds = array<i64: 2>, tpu.core_type = #tpu.core_type<sc_scalar_subcore>, window_params = []} {
    return
  }
}

module attributes {stable_mosaic.version = 11 : i64} {
  func.func private @main(%arg0: i32) attributes {dimension_semantics = [#tpu.dimension_semantics<core_parallel>], iteration_bounds = array<i64: 2>, tpu.core_type = #tpu.core_type<sc_scalar_subcore>, window_params = []} {
    return
  }
}

module attributes {stable_mosaic.version = 11 : i64} {
  func.func @_gcn_fused_kernel(%arg0: memref<64x64xf32, #tpu.memory_space<vmem>>, %arg1: memref<64x16xf32, #tpu.memory_space<vmem>>, %arg2: memref<16x128xf32, #tpu.memory_space<vmem>>, %arg3: memref<1x128xf32, #tpu.memory_space<vmem>>, %arg4: memref<128x128xf32, #tpu.memory_space<vmem>>, %arg5: memref<1x128xf32, #tpu.memory_space<vmem>>, %arg6: memref<128x128xf32, #tpu.memory_space<vmem>>, %arg7: memref<1x128xf32, #tpu.memory_space<vmem>>, %arg8: memref<128x128xf32, #tpu.memory_space<vmem>>, %arg9: memref<1x128xf32, #tpu.memory_space<vmem>>, %arg10: memref<64x128xf32, #tpu.memory_space<vmem>>) attributes {dimension_semantics = [], scalar_prefetch = 0 : i64, scratch_operands = 0 : i64, tpu.core_type = #tpu.core_type<tc>} {
    %c0 = arith.constant 0 : index
    %c0_0 = arith.constant 0 : index
    %0 = vector.load %arg0[%c0, %c0_0] : memref<64x64xf32, #tpu.memory_space<vmem>>, vector<64x64xf32>
    %1 = arith.truncf %0 : vector<64x64xf32> to vector<64x64xbf16>
    %c0_1 = arith.constant 0 : index
    %c0_2 = arith.constant 0 : index
    %2 = vector.load %arg1[%c0_1, %c0_2] : memref<64x16xf32, #tpu.memory_space<vmem>>, vector<64x16xf32>
    %3 = arith.truncf %2 : vector<64x16xf32> to vector<64x16xbf16>
    %c0_3 = arith.constant 0 : index
    %c0_4 = arith.constant 0 : index
    %4 = vector.load %arg2[%c0_3, %c0_4] : memref<16x128xf32, #tpu.memory_space<vmem>>, vector<16x128xf32>
    %5 = arith.truncf %4 : vector<16x128xf32> to vector<16x128xbf16>
    %cst = arith.constant dense<0.000000e+00> : vector<64x128xf32>
    %6 = tpu.matmul %3, %5, %cst {dimension_numbers = #tpu.dot_dimension_numbers<[1], [0], [0], [1], [0, 0, 1, 1], [], []>} : vector<64x16xbf16>, vector<16x128xbf16>, vector<64x128xf32> -> vector<64x128xf32>
    %7 = arith.truncf %6 : vector<64x128xf32> to vector<64x128xbf16>
    %cst_5 = arith.constant dense<0.000000e+00> : vector<64x128xf32>
    %8 = tpu.matmul %1, %7, %cst_5 {dimension_numbers = #tpu.dot_dimension_numbers<[1], [0], [0], [1], [0, 0, 1, 1], [], []>} : vector<64x64xbf16>, vector<64x128xbf16>, vector<64x128xf32> -> vector<64x128xf32>
    %c0_6 = arith.constant 0 : index
    %c0_7 = arith.constant 0 : index
    %9 = vector.load %arg3[%c0_6, %c0_7] : memref<1x128xf32, #tpu.memory_space<vmem>>, vector<1x128xf32>
    %10 = vector.broadcast %9 : vector<1x128xf32> to vector<64x128xf32>
    %11 = arith.addf %8, %10 : vector<64x128xf32>
    %cst_8 = arith.constant 0.000000e+00 : f32
    %12 = vector.broadcast %cst_8 : f32 to vector<64x128xf32>
    %13 = arith.maximumf %11, %12 : vector<64x128xf32>
    %14 = arith.truncf %13 : vector<64x128xf32> to vector<64x128xbf16>
    %c0_9 = arith.constant 0 : index
    %c0_10 = arith.constant 0 : index
    %15 = vector.load %arg4[%c0_9, %c0_10] : memref<128x128xf32, #tpu.memory_space<vmem>>, vector<128x128xf32>
    %16 = arith.truncf %15 : vector<128x128xf32> to vector<128x128xbf16>
    %cst_11 = arith.constant dense<0.000000e+00> : vector<64x128xf32>
    %17 = tpu.matmul %14, %16, %cst_11 {dimension_numbers = #tpu.dot_dimension_numbers<[1], [0], [0], [1], [0, 0, 1, 1], [], []>} : vector<64x128xbf16>, vector<128x128xbf16>, vector<64x128xf32> -> vector<64x128xf32>
    %18 = arith.truncf %17 : vector<64x128xf32> to vector<64x128xbf16>
    %cst_12 = arith.constant dense<0.000000e+00> : vector<64x128xf32>
    %19 = tpu.matmul %1, %18, %cst_12 {dimension_numbers = #tpu.dot_dimension_numbers<[1], [0], [0], [1], [0, 0, 1, 1], [], []>} : vector<64x64xbf16>, vector<64x128xbf16>, vector<64x128xf32> -> vector<64x128xf32>
    %c0_13 = arith.constant 0 : index
    %c0_14 = arith.constant 0 : index
    %20 = vector.load %arg5[%c0_13, %c0_14] : memref<1x128xf32, #tpu.memory_space<vmem>>, vector<1x128xf32>
    %21 = vector.broadcast %20 : vector<1x128xf32> to vector<64x128xf32>
    %22 = arith.addf %19, %21 : vector<64x128xf32>
    %cst_15 = arith.constant 0.000000e+00 : f32
    %23 = vector.broadcast %cst_15 : f32 to vector<64x128xf32>
    %24 = arith.maximumf %22, %23 : vector<64x128xf32>
    %25 = arith.truncf %24 : vector<64x128xf32> to vector<64x128xbf16>
    %c0_16 = arith.constant 0 : index
    %c0_17 = arith.constant 0 : index
    %26 = vector.load %arg6[%c0_16, %c0_17] : memref<128x128xf32, #tpu.memory_space<vmem>>, vector<128x128xf32>
    %27 = arith.truncf %26 : vector<128x128xf32> to vector<128x128xbf16>
    %cst_18 = arith.constant dense<0.000000e+00> : vector<64x128xf32>
    %28 = tpu.matmul %25, %27, %cst_18 {dimension_numbers = #tpu.dot_dimension_numbers<[1], [0], [0], [1], [0, 0, 1, 1], [], []>} : vector<64x128xbf16>, vector<128x128xbf16>, vector<64x128xf32> -> vector<64x128xf32>
    %29 = arith.truncf %28 : vector<64x128xf32> to vector<64x128xbf16>
    %cst_19 = arith.constant dense<0.000000e+00> : vector<64x128xf32>
    %30 = tpu.matmul %1, %29, %cst_19 {dimension_numbers = #tpu.dot_dimension_numbers<[1], [0], [0], [1], [0, 0, 1, 1], [], []>} : vector<64x64xbf16>, vector<64x128xbf16>, vector<64x128xf32> -> vector<64x128xf32>
    %c0_20 = arith.constant 0 : index
    %c0_21 = arith.constant 0 : index
    %31 = vector.load %arg7[%c0_20, %c0_21] : memref<1x128xf32, #tpu.memory_space<vmem>>, vector<1x128xf32>
    %32 = vector.broadcast %31 : vector<1x128xf32> to vector<64x128xf32>
    %33 = arith.addf %30, %32 : vector<64x128xf32>
    %cst_22 = arith.constant 0.000000e+00 : f32
    %34 = vector.broadcast %cst_22 : f32 to vector<64x128xf32>
    %35 = arith.maximumf %33, %34 : vector<64x128xf32>
    %36 = arith.truncf %35 : vector<64x128xf32> to vector<64x128xbf16>
    %c0_23 = arith.constant 0 : index
    %c0_24 = arith.constant 0 : index
    %37 = vector.load %arg8[%c0_23, %c0_24] : memref<128x128xf32, #tpu.memory_space<vmem>>, vector<128x128xf32>
    %38 = arith.truncf %37 : vector<128x128xf32> to vector<128x128xbf16>
    %cst_25 = arith.constant dense<0.000000e+00> : vector<64x128xf32>
    %39 = tpu.matmul %36, %38, %cst_25 {dimension_numbers = #tpu.dot_dimension_numbers<[1], [0], [0], [1], [0, 0, 1, 1], [], []>} : vector<64x128xbf16>, vector<128x128xbf16>, vector<64x128xf32> -> vector<64x128xf32>
    %c0_26 = arith.constant 0 : index
    %c0_27 = arith.constant 0 : index
    %40 = vector.load %arg9[%c0_26, %c0_27] : memref<1x128xf32, #tpu.memory_space<vmem>>, vector<1x128xf32>
    %41 = vector.broadcast %40 : vector<1x128xf32> to vector<64x128xf32>
    %42 = arith.addf %39, %41 : vector<64x128xf32>
    %43 = tpu.iota {dimensions = array<i32: 1>} : vector<64x128xi32>
    %c8_i32 = arith.constant 8 : i32
    %44 = vector.broadcast %c8_i32 : i32 to vector<64x128xi32>
    %45 = arith.cmpi slt, %43, %44 : vector<64x128xi32>
    %cst_28 = arith.constant -1.000000e+30 : f32
    %46 = vector.broadcast %cst_28 : f32 to vector<64x128xf32>
    %47 = arith.select %45, %42, %46 : vector<64x128xi1>, vector<64x128xf32>
    %cst_29 = arith.constant dense<0xFF800000> : vector<64xf32>
    %48 = vector.multi_reduction <maximumf>, %47, %cst_29 [1] : vector<64x128xf32> to vector<64xf32>
    %49 = vector.shape_cast %48 : vector<64xf32> to vector<64x1xf32>
    %50 = vector.broadcast %49 : vector<64x1xf32> to vector<64x128xf32>
    %51 = arith.subf %47, %50 : vector<64x128xf32>
    %52 = math.exp %51 : vector<64x128xf32>
    %cst_30 = arith.constant dense<0.000000e+00> : vector<64xf32>
    %53 = vector.multi_reduction <add>, %52, %cst_30 [1] : vector<64x128xf32> to vector<64xf32>
    %54 = vector.shape_cast %53 : vector<64xf32> to vector<64x1xf32>
    %55 = math.log %54 : vector<64x1xf32>
    %56 = vector.broadcast %55 : vector<64x1xf32> to vector<64x128xf32>
    %57 = arith.subf %51, %56 : vector<64x128xf32>
    %c0_31 = arith.constant 0 : index
    %c0_32 = arith.constant 0 : index
    %58 = vector.load %arg10[%c0_31, %c0_32] : memref<64x128xf32, #tpu.memory_space<vmem>>, vector<64x128xf32>
    tpu.vector_store %arg10[%c0_31, %c0_32], %57 {strides = array<i32>} : memref<64x128xf32, #tpu.memory_space<vmem>>, vector<64x128xf32>,
    return
  }
}

</mosaic_0001>

<llo_original>
// kernel: gcn_forward.1
$region0: #{gcn_forward.1}
  #allocation0 [shape = 'u32[]', space=smem, size = 0x4, offset = 0x4, fixed_abs, tag = 'smem constant byte address 0x4 - core index']
  #allocation1 [shape = 'u32[144,128]{1,0:T(1,128)}', space=vmem, size = 0x12000, scoped, tag = 'internal scratch']
  %s0 = inlined_call_operand.hbm [shape: f32[64,64], index: 0, kind: input, shape index: {}]
  %s1 = inlined_call_operand.vmem [shape: f32[64,16], index: 1, kind: input, shape index: {}]
  %s2 = inlined_call_operand.vmem [shape: f32[16,128], index: 2, kind: input, shape index: {}]
  %s3 = inlined_call_operand.vmem [shape: f32[1,128], index: 3, kind: input, shape index: {}, may-alias: {3,5,7}]
  %s4 = inlined_call_operand.vmem [shape: f32[128,128], index: 4, kind: input, shape index: {}]
  %s5 = inlined_call_operand.vmem [shape: f32[1,128], index: 5, kind: input, shape index: {}, may-alias: {3,5,7}]
  %s6 = inlined_call_operand.vmem [shape: f32[128,128], index: 6, kind: input, shape index: {}]
  %s7 = inlined_call_operand.vmem [shape: f32[1,128], index: 7, kind: input, shape index: {}, may-alias: {3,5,7}]
  %s8 = inlined_call_operand.vmem [shape: f32[128,128], index: 8, kind: input, shape index: {}]
  %s9 = inlined_call_operand.vmem [shape: f32[1,128], index: 9, kind: input, shape index: {}]
  %s10 = inlined_call_operand.vmem [shape: f32[64,128], index: 10, kind: output, shape index: {}]
  %s11 = sld [smem:[#allocation0]]
  $region54: #{gcn_forward.1} parent=0
    _
  %s13 = ssub.s32 1, %s11
  %s14 = scalar_select 0, %s13, %s11
  $region1: #{gcn_forward.1} parent=0
    #allocation2 [shape = 'u8[32768]{0}', space=vmem, size = 0x8000, scoped, tag = 'input window, operand 0, single buffered']
    #allocation3 [shape = 's32[1]{0}', space=sflag, size = 0x4, scoped, tag = 'scoped memory for gcn_forward.1']
    %15 = vsyncpa [#allocation3], 0
    // Predicated region
    $region2: #{gcn_forward.1} parent=1 // pred_check
      _
    $region3: #{gcn_forward.1} parent=1 // pred_check_branch
      %17 = sbr.rel (0) target = $region5
    $region4: #{gcn_forward.1} parent=1 // pred_region
      %s19 = ssub.s32 1024, 1024
      %20 = vsyncadd [#allocation3], %s19
      %s21 = sshll.u32 [#allocation2], 4
      %s22 = int_to_ptr.vmem [resolvable:$true] %s21
      %27 = dma.hbm_to_vmem [thread:$0]  %s0, 1024, %s22, [#allocation3], 128, 128, 8
    $region5: #{gcn_forward.1} parent=1 // pred_fallthru
      _
    // Predicated region
    $region6: #{gcn_forward.1} parent=1 // pred_check
      _
    $region7: #{gcn_forward.1} parent=1 // pred_check_branch
      %29 = sbr.rel (0) target = $region9
    $region8: #{gcn_forward.1} parent=1 // pred_region
      _
    $region9: #{gcn_forward.1} parent=1 // pred_fallthru
      _
    // Predicated region
    $region10: #{gcn_forward.1} parent=1 // pred_check
      _
    $region11: #{gcn_forward.1} parent=1 // pred_check_branch
      %31 = sbr.rel (0) target = $region13
    $region12: #{gcn_forward.1} parent=1 // pred_region
      _
    $region13: #{gcn_forward.1} parent=1 // pred_fallthru
      _
    // Predicated region
    $region14: #{gcn_forward.1} parent=1 // pred_check
      _
    $region15: #{gcn_forward.1} parent=1 // pred_check_branch
      %33 = sbr.rel (0) target = $region17
    $region16: #{gcn_forward.1} parent=1 // pred_region
      _
    $region17: #{gcn_forward.1} parent=1 // pred_fallthru
      _
    // Predicated region
    $region18: #{gcn_forward.1} parent=1 // pred_check
      _
    $region19: #{gcn_forward.1} parent=1 // pred_check_branch
      %35 = sbr.rel (0) target = $region21
    $region20: #{gcn_forward.1} parent=1 // pred_region
      _
    $region21: #{gcn_forward.1} parent=1 // pred_fallthru
      _
    // Predicated region
    $region22: #{gcn_forward.1} parent=1 // pred_check
      _
    $region23: #{gcn_forward.1} parent=1 // pred_check_branch
      %37 = sbr.rel (0) target = $region25
    $region24: #{gcn_forward.1} parent=1 // pred_region
      _
    $region25: #{gcn_forward.1} parent=1 // pred_fallthru
      _
    // Predicated region
    $region26: #{gcn_forward.1} parent=1 // pred_check
      _
    $region27: #{gcn_forward.1} parent=1 // pred_check_branch
      %39 = sbr.rel (0) target = $region29
    $region28: #{gcn_forward.1} parent=1 // pred_region
      _
    $region29: #{gcn_forward.1} parent=1 // pred_fallthru
      _
    // Predicated region
    $region30: #{gcn_forward.1} parent=1 // pred_check
      _
    $region31: #{gcn_forward.1} parent=1 // pred_check_branch
      %41 = sbr.rel (0) target = $region33
    $region32: #{gcn_forward.1} parent=1 // pred_region
      _
    $region33: #{gcn_forward.1} parent=1 // pred_fallthru
      _
    // Predicated region
    $region34: #{gcn_forward.1} parent=1 // pred_check
      _
    $region35: #{gcn_forward.1} parent=1 // pred_check_branch
      %43 = sbr.rel (0) target = $region37
    $region36: #{gcn_forward.1} parent=1 // pred_region
      _
    $region37: #{gcn_forward.1} parent=1 // pred_fallthru
      _
    // Predicated region
    $region38: #{gcn_forward.1} parent=1 // pred_check
      _
    $region39: #{gcn_forward.1} parent=1 // pred_check_branch
      %45 = sbr.rel (0) target = $region41
    $region40: #{gcn_forward.1} parent=1 // pred_region
      _
    $region41: #{gcn_forward.1} parent=1 // pred_fallthru
      _
    // Predicated region
    $region42: #{gcn_forward.1} parent=1 // pred_check
      _
    $region43: #{gcn_forward.1} parent=1 // pred_check_branch
      %47 = sbr.rel (0) target = $region45
    $region44: #{gcn_forward.1} parent=1 // pred_region
      %48 = dma.done [#allocation3], 1024
    $region45: #{gcn_forward.1} parent=1 // pred_fallthru
      _
    %v50 = vld [vmem:[#allocation2] sm:$0xff]
    %v51 = vld [vmem:[#allocation2 + $0x8] sm:$0xff]
    %v52 = vld [vmem:[#allocation2 + $0x10] sm:$0xff]
    %v53 = vld [vmem:[#allocation2 + $0x18] sm:$0xff]
    %v54 = vld [vmem:[#allocation2 + $0x20] sm:$0xff]
    %v55 = vld [vmem:[#allocation2 + $0x28] sm:$0xff]
    %v56 = vld [vmem:[#allocation2 + $0x30] sm:$0xff]
    %v57 = vld [vmem:[#allocation2 + $0x38] sm:$0xff]
    %v58 = vpack.c.bf16 %v51, %v50
    %v59 = vpack.c.bf16 %v53, %v52
    %v60 = vpack.c.bf16 %v55, %v54
    %v61 = vpack.c.bf16 %v57, %v56
    %v62 = vld [vmem:[%s1] sm:$0xff]
    %v63 = vld [vmem:[%s1 + $0x8] sm:$0xff]
    %v64 = vld [vmem:[%s1 + $0x10] sm:$0xff]
    %v65 = vld [vmem:[%s1 + $0x18] sm:$0xff]
    %v66 = vld [vmem:[%s1 + $0x20] sm:$0xff]
    %v67 = vld [vmem:[%s1 + $0x28] sm:$0xff]
    %v68 = vld [vmem:[%s1 + $0x30] sm:$0xff]
    %v69 = vld [vmem:[%s1 + $0x38] sm:$0xff]
    %v70 = vpack.c.bf16 %v63, %v62
    %v71 = vpack.c.bf16 %v65, %v64
    %v72 = vpack.c.bf16 %v67, %v66
    %v73 = vpack.c.bf16 %v69, %v68
    %v74 = vld [vmem:[%s2] sm:$0xff]
    %v75 = vld [vmem:[%s2 + $0x8] sm:$0xff]
    %v76 = vpack.c.bf16 %v75, %v74
    %vm77 = vcmask 130048
    %v79 = vsel %vm77, %v70, 0
    %v82 = vsel %vm77, %v71, 0
    %v85 = vsel %vm77, %v72, 0
    %v88 = vsel %vm77, %v73, 0
    %90 = vmatprep.subr.bf16.mxu0 0
    %91 = vmatpush1.bf16.msra.mxu0 %v76
    %92 = vmatprep.subr.bf16.mxu0 0
    %93 = vmatpush1.bf16.msra.mxu0 0
    %94 = vmatprep.subr.bf16.mxu0 0
    %95 = vmatpush1.bf16.msra.mxu0 0
    %96 = vmatprep.subr.bf16.mxu0 0
    %97 = vmatpush1.bf16.msra.mxu0 0
    %98 = vmatprep.subr.bf16.mxu0 0
    %99 = vmatpush1.bf16.msra.mxu0 0
    %100 = vmatprep.subr.bf16.mxu0 0
    %101 = vmatpush1.bf16.msra.mxu0 0
    %102 = vmatprep.subr.bf16.mxu0 0
    %103 = vmatpush1.bf16.msra.mxu0 0
    %104 = vmatprep.subr.bf16.mxu0 0
    %105 = vmatpush1.bf16.msra.mxu0 0
    %106 = vmatprep.subr.bf16.mxu0 0
    %107 = vmatpush1.bf16.msra.mxu0 0
    %108 = vmatprep.subr.bf16.mxu0 0
    %109 = vmatpush1.bf16.msra.mxu0 0
    %110 = vmatprep.subr.bf16.mxu0 0
    %111 = vmatpush1.bf16.msra.mxu0 0
    %112 = vmatprep.subr.bf16.mxu0 0
    %113 = vmatpush1.bf16.msra.mxu0 0
    %114 = vmatprep.subr.bf16.mxu0 0
    %115 = vmatpush1.bf16.msra.mxu0 0
    %116 = vmatprep.subr.bf16.mxu0 0
    %117 = vmatpush1.bf16.msra.mxu0 0
    %118 = vmatprep.subr.bf16.mxu0 0
    %119 = vmatpush1.bf16.msra.mxu0 0
    %120 = vmatprep.subr.bf16.mxu0 0
    %121 = vmatpush1.bf16.msra.mxu0 0
    %122 = vmatprep.mubr.bf16.mxu0 0
    %123 = vmatmul.mubr.bf16.gmra.mrb[0].mxu0 %v79
    %v124 = vpop.f32.mrb[0].mxu0
    %v125 = vadd.f32 0.0, %v124
    %v126 = vpop.f32.mrb[0].mxu0
    %v127 = vpop.f32.mrb[0].mxu0
    %v128 = vadd.f32 0.0, %v127
    %v129 = vpop.f32.mrb[0].mxu0
    %130 = vmatprep.mubr.bf16.mxu0 0
    %131 = vmatmul.mubr.bf16.gmra.mrb[0].mxu0 %v82
    %v132 = vpop.f32.mrb[0].mxu0
    %v133 = vadd.f32 0.0, %v132
    %v134 = vpop.f32.mrb[0].mxu0
    %v135 = vpop.f32.mrb[0].mxu0
    %v136 = vadd.f32 0.0, %v135
    %v137 = vpop.f32.mrb[0].mxu0
    %138 = vmatprep.mubr.bf16.mxu0 0
    %139 = vmatmul.mubr.bf16.gmra.mrb[0].mxu0 %v85
    %v140 = vpop.f32.mrb[0].mxu0
    %v141 = vadd.f32 0.0, %v140
    %v142 = vpop.f32.mrb[0].mxu0
    %v143 = vpop.f32.mrb[0].mxu0
    %v144 = vadd.f32 0.0, %v143
    %v145 = vpop.f32.mrb[0].mxu0
    %146 = vmatprep.mubr.bf16.mxu0 0
    %147 = vmatmul.mubr.bf16.gmra.mrb[0].mxu0 %v88
    %v148 = vpop.f32.mrb[0].mxu0
    %v149 = vadd.f32 0.0, %v148
    %v150 = vpop.f32.mrb[0].mxu0
    %v151 = vpop.f32.mrb[0].mxu0
    %v152 = vadd.f32 0.0, %v151
    %v153 = vpop.f32.mrb[0].mxu0
    %154 = vdwg.mxu0
    %v155 = vpack.c.bf16 %v128, %v125
    %v156 = vpack.c.bf16 %v136, %v133
    %v157 = vpack.c.bf16 %v144, %v141
    %v158 = vpack.c.bf16 %v152, %v149
    %v159 = vld [vmem:[%s3] sm:$0x1]
    %v161 = vlaneseq
    %v162 = vshrl.u32 %v161, 7
    %v163 = vsub.s32 0, %v162
    %v164 = vrot.slane %v159, %v163
    %vm166 = vcmask 523264
    %v168 = vsel %vm166, %v58, 0
    %v171 = vsel %vm166, %v59, 0
    %v174 = vsel %vm166, %v60, 0
    %v177 = vsel %vm166, %v61, 0
    %179 = vmatprep.subr.bf16.mxu0 0
    %180 = vmatpush1.bf16.msra.mxu0 %v155
    %181 = vmatprep.subr.bf16.mxu0 0
    %182 = vmatpush1.bf16.msra.mxu0 %v156
    %183 = vmatprep.subr.bf16.mxu0 0
    %184 = vmatpush1.bf16.msra.mxu0 %v157
    %185 = vmatprep.subr.bf16.mxu0 0
    %186 = vmatpush1.bf16.msra.mxu0 %v158
    %187 = vmatprep.subr.bf16.mxu0 0
    %188 = vmatpush1.bf16.msra.mxu0 0
    %189 = vmatprep.subr.bf16.mxu0 0
    %190 = vmatpush1.bf16.msra.mxu0 0
    %191 = vmatprep.subr.bf16.mxu0 0
    %192 = vmatpush1.bf16.msra.mxu0 0
    %193 = vmatprep.subr.bf16.mxu0 0
    %194 = vmatpush1.bf16.msra.mxu0 0
    %195 = vmatprep.subr.bf16.mxu0 0
    %196 = vmatpush1.bf16.msra.mxu0 0
    %197 = vmatprep.subr.bf16.mxu0 0
    %198 = vmatpush1.bf16.msra.mxu0 0
    %199 = vmatprep.subr.bf16.mxu0 0
    %200 = vmatpush1.bf16.msra.mxu0 0
    %201 = vmatprep.subr.bf16.mxu0 0
    %202 = vmatpush1.bf16.msra.mxu0 0
    %203 = vmatprep.subr.bf16.mxu0 0
    %204 = vmatpush1.bf16.msra.mxu0 0
    %205 = vmatprep.subr.bf16.mxu0 0
    %206 = vmatpush1.bf16.msra.mxu0 0
    %207 = vmatprep.subr.bf16.mxu0 0
    %208 = vmatpush1.bf16.msra.mxu0 0
    %209 = vmatprep.subr.bf16.mxu0 0
    %210 = vmatpush1.bf16.msra.mxu0 0
    %211 = vmatprep.mubr.bf16.mxu0 0
    %212 = vmatmul.mubr.bf16.gmra.mrb[0].mxu0 %v168
    %v213 = vpop.f32.mrb[0].mxu0
    %v214 = vadd.f32 %v164, %v213
    %v215 = vpop.f32.mrb[0].mxu0
    %v216 = vpop.f32.mrb[0].mxu0
    %v217 = vadd.f32 %v164, %v216
    %v218 = vpop.f32.mrb[0].mxu0
    %219 = vmatprep.mubr.bf16.mxu0 0
    %220 = vmatmul.mubr.bf16.gmra.mrb[0].mxu0 %v171
    %v221 = vpop.f32.mrb[0].mxu0
    %v222 = vadd.f32 %v164, %v221
    %v223 = vpop.f32.mrb[0].mxu0
    %v224 = vpop.f32.mrb[0].mxu0
    %v225 = vadd.f32 %v164, %v224
    %v226 = vpop.f32.mrb[0].mxu0
    %227 = vmatprep.mubr.bf16.mxu0 0
    %228 = vmatmul.mubr.bf16.gmra.mrb[0].mxu0 %v174
    %v229 = vpop.f32.mrb[0].mxu0
    %v230 = vadd.f32 %v164, %v229
    %v231 = vpop.f32.mrb[0].mxu0
    %v232 = vpop.f32.mrb[0].mxu0
    %v233 = vadd.f32 %v164, %v232
    %v234 = vpop.f32.mrb[0].mxu0
    %235 = vmatprep.mubr.bf16.mxu0 0
    %236 = vmatmul.mubr.bf16.gmra.mrb[0].mxu0 %v177
    %v237 = vpop.f32.mrb[0].mxu0
    %v238 = vadd.f32 %v164, %v237
    %v239 = vpop.f32.mrb[0].mxu0
    %v240 = vpop.f32.mrb[0].mxu0
    %v241 = vadd.f32 %v164, %v240
    %v242 = vpop.f32.mrb[0].mxu0
    %243 = vdwg.mxu0
    %v244 = vmax.f32 %v214, 0.0
    %v245 = vmax.f32 %v217, 0.0
    %v246 = vmax.f32 %v222, 0.0
    %v247 = vmax.f32 %v225, 0.0
    %v248 = vmax.f32 %v230, 0.0
    %v249 = vmax.f32 %v233, 0.0
    %v250 = vmax.f32 %v238, 0.0
    %v251 = vmax.f32 %v241, 0.0
    %v252 = vpack.c.bf16 %v245, %v244
    %v253 = vpack.c.bf16 %v247, %v246
    %v254 = vpack.c.bf16 %v249, %v248
    %v255 = vpack.c.bf16 %v251, %v250
    %v256 = vld [vmem:[%s4] sm:$0xff]
    %v257 = vld [vmem:[%s4 + $0x8] sm:$0xff]
    %v258 = vld [vmem:[%s4 + $0x10] sm:$0xff]
    %v259 = vld [vmem:[%s4 + $0x18] sm:$0xff]
    %v260 = vld [vmem:[%s4 + $0x20] sm:$0xff]
    %v261 = vld [vmem:[%s4 + $0x28] sm:$0xff]
    %v262 = vld [vmem:[%s4 + $0x30] sm:$0xff]
    %v263 = vld [vmem:[%s4 + $0x38] sm:$0xff]
    %v264 = vld [vmem:[%s4 + $0x40] sm:$0xff]
    %v265 = vld [vmem:[%s4 + $0x48] sm:$0xff]
    %v266 = vld [vmem:[%s4 + $0x50] sm:$0xff]
    %v267 = vld [vmem:[%s4 + $0x58] sm:$0xff]
    %v268 = vld [vmem:[%s4 + $0x60] sm:$0xff]
    %v269 = vld [vmem:[%s4 + $0x68] sm:$0xff]
    %v270 = vld [vmem:[%s4 + $0x70] sm:$0xff]
    %v271 = vld [vmem:[%s4 + $0x78] sm:$0xff]
    %v272 = vpack.c.bf16 %v257, %v256
    %v273 = vpack.c.bf16 %v259, %v258
    %v274 = vpack.c.bf16 %v261, %v260
    %v275 = vpack.c.bf16 %v263, %v262
    %v276 = vpack.c.bf16 %v265, %v264
    %v277 = vpack.c.bf16 %v267, %v266
    %v278 = vpack.c.bf16 %v269, %v268
    %v279 = vpack.c.bf16 %v271, %v270
    %280 = vmatprep.subr.bf16.mxu0 0
    %281 = vmatpush1.bf16.msra.mxu0 %v272
    %282 = vmatprep.subr.bf16.mxu0 0
    %283 = vmatpush1.bf16.msra.mxu0 %v273
    %284 = vmatprep.subr.bf16.mxu0 0
    %285 = vmatpush1.bf16.msra.mxu0 %v274
    %286 = vmatprep.subr.bf16.mxu0 0
    %287 = vmatpush1.bf16.msra.mxu0 %v275
    %288 = vmatprep.subr.bf16.mxu0 0
    %289 = vmatpush1.bf16.msra.mxu0 %v276
    %290 = vmatprep.subr.bf16.mxu0 0
    %291 = vmatpush1.bf16.msra.mxu0 %v277
    %292 = vmatprep.subr.bf16.mxu0 0
    %293 = vmatpush1.bf16.msra.mxu0 %v278
    %294 = vmatprep.subr.bf16.mxu0 0
    %295 = vmatpush1.bf16.msra.mxu0 %v279
    %296 = vmatprep.subr.bf16.mxu0 0
    %297 = vmatpush1.bf16.msra.mxu0 0
    %298 = vmatprep.subr.bf16.mxu0 0
    %299 = vmatpush1.bf16.msra.mxu0 0
    %300 = vmatprep.subr.bf16.mxu0 0
    %301 = vmatpush1.bf16.msra.mxu0 0
    %302 = vmatprep.subr.bf16.mxu0 0
    %303 = vmatpush1.bf16.msra.mxu0 0
    %304 = vmatprep.subr.bf16.mxu0 0
    %305 = vmatpush1.bf16.msra.mxu0 0
    %306 = vmatprep.subr.bf16.mxu0 0
    %307 = vmatpush1.bf16.msra.mxu0 0
    %308 = vmatprep.subr.bf16.mxu0 0
    %309 = vmatpush1.bf16.msra.mxu0 0
    %310 = vmatprep.subr.bf16.mxu0 0
    %311 = vmatpush1.bf16.msra.mxu0 0
    %312 = vmatprep.mubr.bf16.mxu0 0
    %313 = vmatmul.mubr.bf16.gmra.mrb[0].mxu0 %v252
    %v314 = vpop.f32.mrb[0].mxu0
    %v315 = vadd.f32 0.0, %v314
    %v316 = vpop.f32.mrb[0].mxu0
    %v317 = vpop.f32.mrb[0].mxu0
    %v318 = vadd.f32 0.0, %v317
    %v319 = vpop.f32.mrb[0].mxu0
    %320 = vmatprep.mubr.bf16.mxu0 0
    %321 = vmatmul.mubr.bf16.gmra.mrb[0].mxu0 %v253
    %v322 = vpop.f32.mrb[0].mxu0
    %v323 = vadd.f32 0.0, %v322
    %v324 = vpop.f32.mrb[0].mxu0
    %v325 = vpop.f32.mrb[0].mxu0
    %v326 = vadd.f32 0.0, %v325
    %v327 = vpop.f32.mrb[0].mxu0
    %328 = vmatprep.mubr.bf16.mxu0 0
    %329 = vmatmul.mubr.bf16.gmra.mrb[0].mxu0 %v254
    %v330 = vpop.f32.mrb[0].mxu0
    %v331 = vadd.f32 0.0, %v330
    %v332 = vpop.f32.mrb[0].mxu0
    %v333 = vpop.f32.mrb[0].mxu0
    %v334 = vadd.f32 0.0, %v333
    %v335 = vpop.f32.mrb[0].mxu0
    %336 = vmatprep.mubr.bf16.mxu0 0
    %337 = vmatmul.mubr.bf16.gmra.mrb[0].mxu0 %v255
    %v338 = vpop.f32.mrb[0].mxu0
    %v339 = vadd.f32 0.0, %v338
    %v340 = vpop.f32.mrb[0].mxu0
    %v341 = vpop.f32.mrb[0].mxu0
    %v342 = vadd.f32 0.0, %v341
    %v343 = vpop.f32.mrb[0].mxu0
    %344 = vdwg.mxu0
    %v345 = vpack.c.bf16 %v318, %v315
    %v346 = vpack.c.bf16 %v326, %v323
    %v347 = vpack.c.bf16 %v334, %v331
    %v348 = vpack.c.bf16 %v342, %v339
    %v349 = vld [vmem:[%s5] sm:$0x1]
    %v351 = vlaneseq
    %v352 = vshrl.u32 %v351, 7
    %v353 = vsub.s32 0, %v352
    %v354 = vrot.slane %v349, %v353
    %356 = vmatprep.subr.bf16.mxu0 0
    %357 = vmatpush1.bf16.msra.mxu0 %v345
    %358 = vmatprep.subr.bf16.mxu0 0
    %359 = vmatpush1.bf16.msra.mxu0 %v346
    %360 = vmatprep.subr.bf16.mxu0 0
    %361 = vmatpush1.bf16.msra.mxu0 %v347
    %362 = vmatprep.subr.bf16.mxu0 0
    %363 = vmatpush1.bf16.msra.mxu0 %v348
    %364 = vmatprep.subr.bf16.mxu0 0
    %365 = vmatpush1.bf16.msra.mxu0 0
    %366 = vmatprep.subr.bf16.mxu0 0
    %367 = vmatpush1.bf16.msra.mxu0 0
    %368 = vmatprep.subr.bf16.mxu0 0
    %369 = vmatpush1.bf16.msra.mxu0 0
    %370 = vmatprep.subr.bf16.mxu0 0
    %371 = vmatpush1.bf16.msra.mxu0 0
    %372 = vmatprep.subr.bf16.mxu0 0
    %373 = vmatpush1.bf16.msra.mxu0 0
    %374 = vmatprep.subr.bf16.mxu0 0
    %375 = vmatpush1.bf16.msra.mxu0 0
    %376 = vmatprep.subr.bf16.mxu0 0
    %377 = vmatpush1.bf16.msra.mxu0 0
    %378 = vmatprep.subr.bf16.mxu0 0
    %379 = vmatpush1.bf16.msra.mxu0 0
    %380 = vmatprep.subr.bf16.mxu0 0
    %381 = vmatpush1.bf16.msra.mxu0 0
    %382 = vmatprep.subr.bf16.mxu0 0
    %383 = vmatpush1.bf16.msra.mxu0 0
    %384 = vmatprep.subr.bf16.mxu0 0
    %385 = vmatpush1.bf16.msra.mxu0 0
    %386 = vmatprep.subr.bf16.mxu0 0
    %387 = vmatpush1.bf16.msra.mxu0 0
    %388 = vmatprep.mubr.bf16.mxu0 0
    %389 = vmatmul.mubr.bf16.gmra.mrb[0].mxu0 %v168
    %v390 = vpop.f32.mrb[0].mxu0
    %v391 = vadd.f32 %v354, %v390
    %v392 = vpop.f32.mrb[0].mxu0
    %v393 = vpop.f32.mrb[0].mxu0
    %v394 = vadd.f32 %v354, %v393
    %v395 = vpop.f32.mrb[0].mxu0
    %396 = vmatprep.mubr.bf16.mxu0 0
    %397 = vmatmul.mubr.bf16.gmra.mrb[0].mxu0 %v171
    %v398 = vpop.f32.mrb[0].mxu0
    %v399 = vadd.f32 %v354, %v398
    %v400 = vpop.f32.mrb[0].mxu0
    %v401 = vpop.f32.mrb[0].mxu0
    %v402 = vadd.f32 %v354, %v401
    %v403 = vpop.f32.mrb[0].mxu0
    %404 = vmatprep.mubr.bf16.mxu0 0
    %405 = vmatmul.mubr.bf16.gmra.mrb[0].mxu0 %v174
    %v406 = vpop.f32.mrb[0].mxu0
    %v407 = vadd.f32 %v354, %v406
    %v408 = vpop.f32.mrb[0].mxu0
    %v409 = vpop.f32.mrb[0].mxu0
    %v410 = vadd.f32 %v354, %v409
    %v411 = vpop.f32.mrb[0].mxu0
    %412 = vmatprep.mubr.bf16.mxu0 0
    %413 = vmatmul.mubr.bf16.gmra.mrb[0].mxu0 %v177
    %v414 = vpop.f32.mrb[0].mxu0
    %v415 = vadd.f32 %v354, %v414
    %v416 = vpop.f32.mrb[0].mxu0
    %v417 = vpop.f32.mrb[0].mxu0
    %v418 = vadd.f32 %v354, %v417
    %v419 = vpop.f32.mrb[0].mxu0
    %420 = vdwg.mxu0
    %v421 = vmax.f32 %v391, 0.0
    %v422 = vmax.f32 %v394, 0.0
    %v423 = vmax.f32 %v399, 0.0
    %v424 = vmax.f32 %v402, 0.0
    %v425 = vmax.f32 %v407, 0.0
    %v426 = vmax.f32 %v410, 0.0
    %v427 = vmax.f32 %v415, 0.0
    %v428 = vmax.f32 %v418, 0.0
    %v429 = vpack.c.bf16 %v422, %v421
    %v430 = vpack.c.bf16 %v424, %v423
    %v431 = vpack.c.bf16 %v426, %v425
    %v432 = vpack.c.bf16 %v428, %v427
    %v433 = vld [vmem:[%s6] sm:$0xff]
    %v434 = vld [vmem:[%s6 + $0x8] sm:$0xff]
    %v435 = vld [vmem:[%s6 + $0x10] sm:$0xff]
    %v436 = vld [vmem:[%s6 + $0x18] sm:$0xff]
    %v437 = vld [vmem:[%s6 + $0x20] sm:$0xff]
    %v438 = vld [vmem:[%s6 + $0x28] sm:$0xff]
    %v439 = vld [vmem:[%s6 + $0x30] sm:$0xff]
    %v440 = vld [vmem:[%s6 + $0x38] sm:$0xff]
    %v441 = vld [vmem:[%s6 + $0x40] sm:$0xff]
    %v442 = vld [vmem:[%s6 + $0x48] sm:$0xff]
    %v443 = vld [vmem:[%s6 + $0x50] sm:$0xff]
    %v444 = vld [vmem:[%s6 + $0x58] sm:$0xff]
    %v445 = vld [vmem:[%s6 + $0x60] sm:$0xff]
    %v446 = vld [vmem:[%s6 + $0x68] sm:$0xff]
    %v447 = vld [vmem:[%s6 + $0x70] sm:$0xff]
    %v448 = vld [vmem:[%s6 + $0x78] sm:$0xff]
    %v449 = vpack.c.bf16 %v434, %v433
    %v450 = vpack.c.bf16 %v436, %v435
    %v451 = vpack.c.bf16 %v438, %v437
    %v452 = vpack.c.bf16 %v440, %v439
    %v453 = vpack.c.bf16 %v442, %v441
    %v454 = vpack.c.bf16 %v444, %v443
    %v455 = vpack.c.bf16 %v446, %v445
    %v456 = vpack.c.bf16 %v448, %v447
    %457 = vmatprep.subr.bf16.mxu0 0
    %458 = vmatpush1.bf16.msra.mxu0 %v449
    %459 = vmatprep.subr.bf16.mxu0 0
    %460 = vmatpush1.bf16.msra.mxu0 %v450
    %461 = vmatprep.subr.bf16.mxu0 0
    %462 = vmatpush1.bf16.msra.mxu0 %v451
    %463 = vmatprep.subr.bf16.mxu0 0
    %464 = vmatpush1.bf16.msra.mxu0 %v452
    %465 = vmatprep.subr.bf16.mxu0 0
    %466 = vmatpush1.bf16.msra.mxu0 %v453
    %467 = vmatprep.subr.bf16.mxu0 0
    %468 = vmatpush1.bf16.msra.mxu0 %v454
    %469 = vmatprep.subr.bf16.mxu0 0
    %470 = vmatpush1.bf16.msra.mxu0 %v455
    %471 = vmatprep.subr.bf16.mxu0 0
    %472 = vmatpush1.bf16.msra.mxu0 %v456
    %473 = vmatprep.subr.bf16.mxu0 0
    %474 = vmatpush1.bf16.msra.mxu0 0
    %475 = vmatprep.subr.bf16.mxu0 0
    %476 = vmatpush1.bf16.msra.mxu0 0
    %477 = vmatprep.subr.bf16.mxu0 0
    %478 = vmatpush1.bf16.msra.mxu0 0
    %479 = vmatprep.subr.bf16.mxu0 0
    %480 = vmatpush1.bf16.msra.mxu0 0
    %481 = vmatprep.subr.bf16.mxu0 0
    %482 = vmatpush1.bf16.msra.mxu0 0
    %483 = vmatprep.subr.bf16.mxu0 0
    %484 = vmatpush1.bf16.msra.mxu0 0
    %485 = vmatprep.subr.bf16.mxu0 0
    %486 = vmatpush1.bf16.msra.mxu0 0
    %487 = vmatprep.subr.bf16.mxu0 0
    %488 = vmatpush1.bf16.msra.mxu0 0
    %489 = vmatprep.mubr.bf16.mxu0 0
    %490 = vmatmul.mubr.bf16.gmra.mrb[0].mxu0 %v429
    %v491 = vpop.f32.mrb[0].mxu0
    %v492 = vadd.f32 0.0, %v491
    %v493 = vpop.f32.mrb[0].mxu0
    %v494 = vpop.f32.mrb[0].mxu0
    %v495 = vadd.f32 0.0, %v494
    %v496 = vpop.f32.mrb[0].mxu0
    %497 = vmatprep.mubr.bf16.mxu0 0
    %498 = vmatmul.mubr.bf16.gmra.mrb[0].mxu0 %v430
    %v499 = vpop.f32.mrb[0].mxu0
    %v500 = vadd.f32 0.0, %v499
    %v501 = vpop.f32.mrb[0].mxu0
    %v502 = vpop.f32.mrb[0].mxu0
    %v503 = vadd.f32 0.0, %v502
    %v504 = vpop.f32.mrb[0].mxu0
    %505 = vmatprep.mubr.bf16.mxu0 0
    %506 = vmatmul.mubr.bf16.gmra.mrb[0].mxu0 %v431
    %v507 = vpop.f32.mrb[0].mxu0
    %v508 = vadd.f32 0.0, %v507
    %v509 = vpop.f32.mrb[0].mxu0
    %v510 = vpop.f32.mrb[0].mxu0
    %v511 = vadd.f32 0.0, %v510
    %v512 = vpop.f32.mrb[0].mxu0
    %513 = vmatprep.mubr.bf16.mxu0 0
    %514 = vmatmul.mubr.bf16.gmra.mrb[0].mxu0 %v432
    %v515 = vpop.f32.mrb[0].mxu0
    %v516 = vadd.f32 0.0, %v515
    %v517 = vpop.f32.mrb[0].mxu0
    %v518 = vpop.f32.mrb[0].mxu0
    %v519 = vadd.f32 0.0, %v518
    %v520 = vpop.f32.mrb[0].mxu0
    %521 = vdwg.mxu0
    %v522 = vpack.c.bf16 %v495, %v492
    %v523 = vpack.c.bf16 %v503, %v500
    %v524 = vpack.c.bf16 %v511, %v508
    %v525 = vpack.c.bf16 %v519, %v516
    %v526 = vld [vmem:[%s7] sm:$0x1]
    %v528 = vlaneseq
    %v529 = vshrl.u32 %v528, 7
    %v530 = vsub.s32 0, %v529
    %v531 = vrot.slane %v526, %v530
    %533 = vmatprep.subr.bf16.mxu0 0
    %534 = vmatpush1.bf16.msra.mxu0 %v522
    %535 = vmatprep.subr.bf16.mxu0 0
    %536 = vmatpush1.bf16.msra.mxu0 %v523
    %537 = vmatprep.subr.bf16.mxu0 0
    %538 = vmatpush1.bf16.msra.mxu0 %v524
    %539 = vmatprep.subr.bf16.mxu0 0
    %540 = vmatpush1.bf16.msra.mxu0 %v525
    %541 = vmatprep.subr.bf16.mxu0 0
    %542 = vmatpush1.bf16.msra.mxu0 0
    %543 = vmatprep.subr.bf16.mxu0 0
    %544 = vmatpush1.bf16.msra.mxu0 0
    %545 = vmatprep.subr.bf16.mxu0 0
    %546 = vmatpush1.bf16.msra.mxu0 0
    %547 = vmatprep.subr.bf16.mxu0 0
    %548 = vmatpush1.bf16.msra.mxu0 0
    %549 = vmatprep.subr.bf16.mxu0 0
    %550 = vmatpush1.bf16.msra.mxu0 0
    %551 = vmatprep.subr.bf16.mxu0 0
    %552 = vmatpush1.bf16.msra.mxu0 0
    %553 = vmatprep.subr.bf16.mxu0 0
    %554 = vmatpush1.bf16.msra.mxu0 0
    %555 = vmatprep.subr.bf16.mxu0 0
    %556 = vmatpush1.bf16.msra.mxu0 0
    %557 = vmatprep.subr.bf16.mxu0 0
    %558 = vmatpush1.bf16.msra.mxu0 0
    %559 = vmatprep.subr.bf16.mxu0 0
    %560 = vmatpush1.bf16.msra.mxu0 0
    %561 = vmatprep.subr.bf16.mxu0 0
    %562 = vmatpush1.bf16.msra.mxu0 0
    %563 = vmatprep.subr.bf16.mxu0 0
    %564 = vmatpush1.bf16.msra.mxu0 0
    %565 = vmatprep.mubr.bf16.mxu0 0
    %566 = vmatmul.mubr.bf16.gmra.mrb[0].mxu0 %v168
    %v567 = vpop.f32.mrb[0].mxu0
    %v568 = vadd.f32 %v531, %v567
    %v569 = vpop.f32.mrb[0].mxu0
    %v570 = vpop.f32.mrb[0].mxu0
    %v571 = vadd.f32 %v531, %v570
    %v572 = vpop.f32.mrb[0].mxu0
    %573 = vmatprep.mubr.bf16.mxu0 0
    %574 = vmatmul.mubr.bf16.gmra.mrb[0].mxu0 %v171
    %v575 = vpop.f32.mrb[0].mxu0
    %v576 = vadd.f32 %v531, %v575
    %v577 = vpop.f32.mrb[0].mxu0
    %v578 = vpop.f32.mrb[0].mxu0
    %v579 = vadd.f32 %v531, %v578
    %v580 = vpop.f32.mrb[0].mxu0
    %581 = vmatprep.mubr.bf16.mxu0 0
    %582 = vmatmul.mubr.bf16.gmra.mrb[0].mxu0 %v174
    %v583 = vpop.f32.mrb[0].mxu0
    %v584 = vadd.f32 %v531, %v583
    %v585 = vpop.f32.mrb[0].mxu0
    %v586 = vpop.f32.mrb[0].mxu0
    %v587 = vadd.f32 %v531, %v586
    %v588 = vpop.f32.mrb[0].mxu0
    %589 = vmatprep.mubr.bf16.mxu0 0
    %590 = vmatmul.mubr.bf16.gmra.mrb[0].mxu0 %v177
    %v591 = vpop.f32.mrb[0].mxu0
    %v592 = vadd.f32 %v531, %v591
    %v593 = vpop.f32.mrb[0].mxu0
    %v594 = vpop.f32.mrb[0].mxu0
    %v595 = vadd.f32 %v531, %v594
    %v596 = vpop.f32.mrb[0].mxu0
    %597 = vdwg.mxu0
    %v598 = vmax.f32 %v568, 0.0
    %v599 = vmax.f32 %v571, 0.0
    %v600 = vmax.f32 %v576, 0.0
    %v601 = vmax.f32 %v579, 0.0
    %v602 = vmax.f32 %v584, 0.0
    %v603 = vmax.f32 %v587, 0.0
    %v604 = vmax.f32 %v592, 0.0
    %v605 = vmax.f32 %v595, 0.0
    %v606 = vpack.c.bf16 %v599, %v598
    %v607 = vpack.c.bf16 %v601, %v600
    %v608 = vpack.c.bf16 %v603, %v602
    %v609 = vpack.c.bf16 %v605, %v604
    %v610 = vld [vmem:[%s8] sm:$0xff]
    %v611 = vld [vmem:[%s8 + $0x8] sm:$0xff]
    %v612 = vld [vmem:[%s8 + $0x10] sm:$0xff]
    %v613 = vld [vmem:[%s8 + $0x18] sm:$0xff]
    %v614 = vld [vmem:[%s8 + $0x20] sm:$0xff]
    %v615 = vld [vmem:[%s8 + $0x28] sm:$0xff]
    %v616 = vld [vmem:[%s8 + $0x30] sm:$0xff]
    %v617 = vld [vmem:[%s8 + $0x38] sm:$0xff]
    %v618 = vld [vmem:[%s8 + $0x40] sm:$0xff]
    %v619 = vld [vmem:[%s8 + $0x48] sm:$0xff]
    %v620 = vld [vmem:[%s8 + $0x50] sm:$0xff]
    %v621 = vld [vmem:[%s8 + $0x58] sm:$0xff]
    %v622 = vld [vmem:[%s8 + $0x60] sm:$0xff]
    %v623 = vld [vmem:[%s8 + $0x68] sm:$0xff]
    %v624 = vld [vmem:[%s8 + $0x70] sm:$0xff]
    %v625 = vld [vmem:[%s8 + $0x78] sm:$0xff]
    %v626 = vpack.c.bf16 %v611, %v610
    %v627 = vpack.c.bf16 %v613, %v612
    %v628 = vpack.c.bf16 %v615, %v614
    %v629 = vpack.c.bf16 %v617, %v616
    %v630 = vpack.c.bf16 %v619, %v618
    %v631 = vpack.c.bf16 %v621, %v620
    %v632 = vpack.c.bf16 %v623, %v622
    %v633 = vpack.c.bf16 %v625, %v624
    %v634 = vld [vmem:[%s9] sm:$0x1]
    %v636 = vlaneseq
    %v637 = vshrl.u32 %v636, 7
    %v638 = vsub.s32 0, %v637
    %v639 = vrot.slane %v634, %v638
    %641 = vmatprep.subr.bf16.mxu0 0
    %642 = vmatpush1.bf16.msra.mxu0 %v626
    %643 = vmatprep.subr.bf16.mxu0 0
    %644 = vmatpush1.bf16.msra.mxu0 %v627
    %645 = vmatprep.subr.bf16.mxu0 0
    %646 = vmatpush1.bf16.msra.mxu0 %v628
    %647 = vmatprep.subr.bf16.mxu0 0
    %648 = vmatpush1.bf16.msra.mxu0 %v629
    %649 = vmatprep.subr.bf16.mxu0 0
    %650 = vmatpush1.bf16.msra.mxu0 %v630
    %651 = vmatprep.subr.bf16.mxu0 0
    %652 = vmatpush1.bf16.msra.mxu0 %v631
    %653 = vmatprep.subr.bf16.mxu0 0
    %654 = vmatpush1.bf16.msra.mxu0 %v632
    %655 = vmatprep.subr.bf16.mxu0 0
    %656 = vmatpush1.bf16.msra.mxu0 %v633
    %657 = vmatprep.subr.bf16.mxu0 0
    %658 = vmatpush1.bf16.msra.mxu0 0
    %659 = vmatprep.subr.bf16.mxu0 0
    %660 = vmatpush1.bf16.msra.mxu0 0
    %661 = vmatprep.subr.bf16.mxu0 0
    %662 = vmatpush1.bf16.msra.mxu0 0
    %663 = vmatprep.subr.bf16.mxu0 0
    %664 = vmatpush1.bf16.msra.mxu0 0
    %665 = vmatprep.subr.bf16.mxu0 0
    %666 = vmatpush1.bf16.msra.mxu0 0
    %667 = vmatprep.subr.bf16.mxu0 0
    %668 = vmatpush1.bf16.msra.mxu0 0
    %669 = vmatprep.subr.bf16.mxu0 0
    %670 = vmatpush1.bf16.msra.mxu0 0
    %671 = vmatprep.subr.bf16.mxu0 0
    %672 = vmatpush1.bf16.msra.mxu0 0
    %673 = vmatprep.mubr.bf16.mxu0 0
    %674 = vmatmul.mubr.bf16.gmra.mrb[0].mxu0 %v606
    %v675 = vpop.f32.mrb[0].mxu0
    %v676 = vadd.f32 %v639, %v675
    %v677 = vpop.f32.mrb[0].mxu0
    %v678 = vpop.f32.mrb[0].mxu0
    %v679 = vadd.f32 %v639, %v678
    %v680 = vpop.f32.mrb[0].mxu0
    %681 = vmatprep.mubr.bf16.mxu0 0
    %682 = vmatmul.mubr.bf16.gmra.mrb[0].mxu0 %v607
    %v683 = vpop.f32.mrb[0].mxu0
    %v684 = vadd.f32 %v639, %v683
    %v685 = vpop.f32.mrb[0].mxu0
    %v686 = vpop.f32.mrb[0].mxu0
    %v687 = vadd.f32 %v639, %v686
    %v688 = vpop.f32.mrb[0].mxu0
    %689 = vmatprep.mubr.bf16.mxu0 0
    %690 = vmatmul.mubr.bf16.gmra.mrb[0].mxu0 %v608
    %v691 = vpop.f32.mrb[0].mxu0
    %v692 = vadd.f32 %v639, %v691
    %v693 = vpop.f32.mrb[0].mxu0
    %v694 = vpop.f32.mrb[0].mxu0
    %v695 = vadd.f32 %v639, %v694
    %v696 = vpop.f32.mrb[0].mxu0
    %697 = vmatprep.mubr.bf16.mxu0 0
    %698 = vmatmul.mubr.bf16.gmra.mrb[0].mxu0 %v609
    %v699 = vpop.f32.mrb[0].mxu0
    %v700 = vadd.f32 %v639, %v699
    %v701 = vpop.f32.mrb[0].mxu0
    %v702 = vpop.f32.mrb[0].mxu0
    %v703 = vadd.f32 %v639, %v702
    %v704 = vpop.f32.mrb[0].mxu0
    %705 = vdwg.mxu0
    %v706 = vlaneseq
    %v707 = vand.u32 %v706, 127
    %vm708 = vcmp.lt.s32.totalorder %v707, 8
    %v709 = vsel %vm708, %v676, -1e+30
    %v710 = vsel %vm708, %v679, -1e+30
    %v711 = vsel %vm708, %v684, -1e+30
    %v712 = vsel %vm708, %v687, -1e+30
    %v713 = vsel %vm708, %v692, -1e+30
    %v714 = vsel %vm708, %v695, -1e+30
    %v715 = vsel %vm708, %v700, -1e+30
    %v716 = vsel %vm708, %v703, -1e+30
    %717 = vmax.xlane.f32.xlu0 %v709
    %v718 = vpop.xlane.xlu0 %717
    %719 = vmax.xlane.f32.xlu0 %v710
    %v720 = vpop.xlane.xlu0 %719
    %721 = vmax.xlane.f32.xlu0 %v711
    %v722 = vpop.xlane.xlu0 %721
    %723 = vmax.xlane.f32.xlu0 %v712
    %v724 = vpop.xlane.xlu0 %723
    %725 = vmax.xlane.f32.xlu0 %v713
    %v726 = vpop.xlane.xlu0 %725
    %727 = vmax.xlane.f32.xlu0 %v714
    %v728 = vpop.xlane.xlu0 %727
    %729 = vmax.xlane.f32.xlu0 %v715
    %v730 = vpop.xlane.xlu0 %729
    %731 = vmax.xlane.f32.xlu0 %v716
    %v732 = vpop.xlane.xlu0 %731
    %v733 = vsub.f32 %v709, %v718
    %v734 = vsub.f32 %v710, %v720
    %v735 = vsub.f32 %v711, %v722
    %v736 = vsub.f32 %v712, %v724
    %v737 = vsub.f32 %v713, %v726
    %v738 = vsub.f32 %v714, %v728
    %v739 = vsub.f32 %v715, %v730
    %v740 = vsub.f32 %v716, %v732
    %v741 = vmul.f32 %v733, 1.442695
    %v742 = vpow.pop %v741
    %v743 = vmul.f32 %v734, 1.442695
    %v744 = vpow.pop %v743
    %v745 = vmul.f32 %v735, 1.442695
    %v746 = vpow.pop %v745
    %v747 = vmul.f32 %v736, 1.442695
    %v748 = vpow.pop %v747
    %v749 = vmul.f32 %v737, 1.442695
    %v750 = vpow.pop %v749
    %v751 = vmul.f32 %v738, 1.442695
    %v752 = vpow.pop %v751
    %v753 = vmul.f32 %v739, 1.442695
    %v754 = vpow.pop %v753
    %v755 = vmul.f32 %v740, 1.442695
    %v756 = vpow.pop %v755
    %757 = vadd.xlane.f32.xlu0 %v742
    %v758 = vpop.xlane.xlu0 %757
    %759 = vadd.xlane.f32.xlu0 %v744
    %v760 = vpop.xlane.xlu0 %759
    %761 = vadd.xlane.f32.xlu0 %v746
    %v762 = vpop.xlane.xlu0 %761
    %763 = vadd.xlane.f32.xlu0 %v748
    %v764 = vpop.xlane.xlu0 %763
    %765 = vadd.xlane.f32.xlu0 %v750
    %v766 = vpop.xlane.xlu0 %765
    %767 = vadd.xlane.f32.xlu0 %v752
    %v768 = vpop.xlane.xlu0 %767
    %769 = vadd.xlane.f32.xlu0 %v754
    %v770 = vpop.xlane.xlu0 %769
    %771 = vadd.xlane.f32.xlu0 %v756
    %v772 = vpop.xlane.xlu0 %771
    %v773 = vlog2.pop %v758
    %v774 = vmul.f32 %v773, 0.6931472
    %v775 = vlog2.pop %v760
    %v776 = vmul.f32 %v775, 0.6931472
    %v777 = vlog2.pop %v762
    %v778 = vmul.f32 %v777, 0.6931472
    %v779 = vlog2.pop %v764
    %v780 = vmul.f32 %v779, 0.6931472
    %v781 = vlog2.pop %v766
    %v782 = vmul.f32 %v781, 0.6931472
    %v783 = vlog2.pop %v768
    %v784 = vmul.f32 %v783, 0.6931472
    %v785 = vlog2.pop %v770
    %v786 = vmul.f32 %v785, 0.6931472
    %v787 = vlog2.pop %v772
    %v788 = vmul.f32 %v787, 0.6931472
    %v789 = vsub.f32 %v733, %v774
    %v790 = vsub.f32 %v734, %v776
    %v791 = vsub.f32 %v735, %v778
    %v792 = vsub.f32 %v736, %v780
    %v793 = vsub.f32 %v737, %v782
    %v794 = vsub.f32 %v738, %v784
    %v795 = vsub.f32 %v739, %v786
    %v796 = vsub.f32 %v740, %v788
    %797 = vst [vmem:[%s10] sm:$0xff] %v789
    %798 = vst [vmem:[%s10 + $0x8] sm:$0xff] %v790
    %799 = vst [vmem:[%s10 + $0x10] sm:$0xff] %v791
    %800 = vst [vmem:[%s10 + $0x18] sm:$0xff] %v792
    %801 = vst [vmem:[%s10 + $0x20] sm:$0xff] %v793
    %802 = vst [vmem:[%s10 + $0x28] sm:$0xff] %v794
    %803 = vst [vmem:[%s10 + $0x30] sm:$0xff] %v795
    %804 = vst [vmem:[%s10 + $0x38] sm:$0xff] %v796
    // Predicated region
    $region46: #{gcn_forward.1} parent=1 // pred_check
      _
    $region47: #{gcn_forward.1} parent=1 // pred_check_branch
      %806 = sbr.rel (0) target = $region49
    $region48: #{gcn_forward.1} parent=1 // pred_region
      _
    $region49: #{gcn_forward.1} parent=1 // pred_fallthru
      _
    // Predicated region
    $region50: #{gcn_forward.1} parent=1 // pred_check
      _
    $region51: #{gcn_forward.1} parent=1 // pred_check_branch
      %808 = sbr.rel (0) target = $region53
    $region52: #{gcn_forward.1} parent=1 // pred_region
      _
    $region53: #{gcn_forward.1} parent=1 // pred_fallthru
      _
    %809 = vsyncpa [#allocation3], 1

</llo_original>
